<compile_context>
chip_gen: v7x
topology: tpu7x:2x2x1
jax: 0.10.0
libtpu: 0.0.40
codegen_flags: <defaults>
</compile_context>

<pallas_src>
import functools

import jax
import jax.numpy as jnp
from jax import lax
from jax.experimental import pallas as pl
from jax.experimental.pallas import tpu as pltpu


def _round_up(n, m):
    return ((n + m - 1) // m) * m


def _make_kernel(dim_mid):
    def kernel(x_ref, w1f_ref, b1f_ref, w2_ref, b2_ref, w3_ref, bf_ref, o_ref):
        x = x_ref[...]                                              # (TM, dim_in) bf16

        # Fused layer-1 + residual:  hf = [W1; Wres; 0] @ x^T + [b1; 0]   (R, TM) f32
        hf = lax.dot_general(w1f_ref[...], x, (((1,), (1,)), ((), ())),
                             preferred_element_type=jnp.float32)
        hf = hf + b1f_ref[...]
        h = jnp.maximum(hf[:dim_mid], 0.0).astype(x.dtype)          # (dim_mid, TM) bf16
        res = hf[dim_mid:dim_mid + 1]                               # (1, TM) residual (f32)

        # Layer 2: h2 = relu(W2 @ h + b2)                            (dim_mid, TM)
        h2 = lax.dot_general(w2_ref[...], h, (((1,), (0,)), ((), ())),
                             preferred_element_type=jnp.float32)
        h2 = jnp.maximum(h2 + b2_ref[...], 0.0).astype(x.dtype)

        # Layer 3 (dim_mid -> 1), then add residual + folded scalar bias.
        mlp = lax.dot_general(w3_ref[...], h2, (((1,), (0,)), ((), ())),
                              preferred_element_type=jnp.float32)   # (1, TM)
        out = jnp.maximum(mlp + res + bf_ref[0, 0], 0.0)            # lane-dense (1, TM)

        # Dropout layers are identity in eval mode (omitted).
        o_ref[...] = out.reshape(o_ref.shape).astype(o_ref.dtype)   # (1, 1, TM)
    return kernel


def _prepare_params(params):
    """Fold residual into W1 (extra, sublane-padded rows) and pre-cast to bf16."""
    w1, b1, w2, b2, w3, b3, wr, br = params
    dim_mid, dim_in = w1.shape
    rows = _round_up(dim_mid + 1, 8)
    w1f = jnp.zeros((rows, dim_in), jnp.float32)
    w1f = w1f.at[:dim_mid].set(w1).at[dim_mid].set(wr[0])
    b1f = jnp.zeros((rows, 1), jnp.float32).at[:dim_mid].set(b1)
    bf = (b3 + br).reshape(1, 1).astype(jnp.float32)                # folded scalar bias
    return (w1f.astype(jnp.bfloat16), b1f,
            w2.astype(jnp.bfloat16), b2,
            w3.astype(jnp.bfloat16), bf)


def _pick_tile(M, tile_rows):
    """Row tile (multiple of 8) and tile count; prefer an even count >= 2 (v7x megacore)."""
    tm = min(tile_rows, _round_up(max(M, 8), 8))
    nt = pl.cdiv(M, tm)
    if nt == 1 and M >= 4096:
        nt = 2
    elif nt > 1 and nt % 2 == 1:
        nt += 1
    if nt > 1:
        tm = _round_up(pl.cdiv(M, nt), 8)
        nt = pl.cdiv(M, tm)
    return tm, nt


@functools.partial(jax.jit, static_argnames=("tile_rows",))
def predictor_forward(x, params, *, tile_rows=32768):
    """x: (batch, seq, dim_in) float32 or bfloat16.  Returns (batch, seq, 1) float32.

    Streams x in bfloat16 (halves the dominant HBM read); all matmuls use bf16
    MXU operands with f32 accumulation.
    """
    w1f, b1f, w2, b2, w3, bf = _prepare_params(params)
    batch, seq, dim_in = x.shape
    dim_mid = w2.shape[0]
    rows = w1f.shape[0]

    M = batch * seq
    x2d = x.reshape(M, dim_in).astype(jnp.bfloat16)                 # bf16 streaming default

    tm, num_tiles = _pick_tile(M, tile_rows)

    # VMEM budget: double-buffered, lane-padded x tile + double-buffered output + slack.
    lane_pad = _round_up(dim_in, 128)
    need = 2 * tm * lane_pad * 2 + 2 * _round_up(tm, 128) * 4 + (4 << 20)
    vmem_limit = int(max(need, 32 << 20))

    weight_bytes = (w1f.size + w2.size + w3.size) * 2 + (b1f.size + b2.size + 1) * 4
    ce = pl.CostEstimate(
        flops=int(2 * M * (dim_in * (dim_mid + 1) + dim_mid * dim_mid + dim_mid)),
        transcendentals=0,
        bytes_accessed=int(M * dim_in * 2 + M * 4 + weight_bytes))

    out = pl.pallas_call(
        _make_kernel(dim_mid),
        out_shape=jax.ShapeDtypeStruct((num_tiles, 1, tm), jnp.float32),
        grid=(num_tiles,),
        in_specs=[
            pl.BlockSpec((tm, dim_in), lambda i: (i, 0)),            # x: streamed tiles
            pl.BlockSpec((rows, dim_in), lambda i: (0, 0)),          # [W1; Wres; 0] (resident)
            pl.BlockSpec((rows, 1), lambda i: (0, 0)),               # [b1; 0]
            pl.BlockSpec((dim_mid, dim_mid), lambda i: (0, 0)),      # W2
            pl.BlockSpec((dim_mid, 1), lambda i: (0, 0)),            # b2
            pl.BlockSpec((1, dim_mid), lambda i: (0, 0)),            # W3
            pl.BlockSpec(memory_space=pltpu.MemorySpace.SMEM),       # folded bias (scalar)
        ],
        out_specs=pl.BlockSpec((1, 1, tm), lambda i: (i, 0, 0)),     # lane-dense rows
        compiler_params=pltpu.CompilerParams(
            dimension_semantics=("parallel",),
            vmem_limit_bytes=vmem_limit),
        cost_estimate=ce,
    )(x2d, w1f, b1f, w2, b2, w3, bf)

    # (num_tiles, 1, tm) -> flat rows -> drop ragged tail -> (batch, seq, 1)
    return out.reshape(num_tiles * tm)[:M].reshape(batch, seq, 1)


def init_params(key, dim_in):
    """Deterministic synthetic weights, PyTorch Linear layout (out_features, in_features)."""
    dim_mid = dim_in // 2
    ks = jax.random.split(key, 8)
    s = 0.1
    w1 = s * jax.random.normal(ks[0], (dim_mid, dim_in), jnp.float32)
    b1 = s * jax.random.normal(ks[1], (dim_mid, 1), jnp.float32)
    w2 = s * jax.random.normal(ks[2], (dim_mid, dim_mid), jnp.float32)
    b2 = s * jax.random.normal(ks[3], (dim_mid, 1), jnp.float32)
    w3 = s * jax.random.normal(ks[4], (1, dim_mid), jnp.float32)
    b3 = s * jax.random.normal(ks[5], (1, 1), jnp.float32)
    wr = s * jax.random.normal(ks[6], (1, dim_in), jnp.float32)
    br = s * jax.random.normal(ks[7], (1, 1), jnp.float32)
    return (w1, b1, w2, b2, w3, b3, wr, br)


def reference_forward_f32(x, params):
    """Plain-JAX f32 reference of the PyTorch module (eval-mode dropout)."""
    w1, b1, w2, b2, w3, b3, wr, br = params
    hp = lax.Precision.HIGHEST
    h1 = jnp.maximum(jnp.dot(x, w1.T, precision=hp) + b1[:, 0], 0.0)
    h2 = jnp.maximum(jnp.dot(h1, w2.T, precision=hp) + b2[:, 0], 0.0)
    mlp = jnp.dot(h2, w3.T, precision=hp) + b3[:, 0]
    res = jnp.dot(x, wr.T, precision=hp) + br[:, 0]
    return jnp.maximum(mlp + res, 0.0)


def reference_forward_bf16(x, params):
    """Reference that mimics the kernel's bf16-operand / f32-accumulate matmuls."""
    w1, b1, w2, b2, w3, b3, wr, br = params
    hp = lax.Precision.HIGHEST
    q = lambda a: a.astype(jnp.bfloat16).astype(jnp.float32)
    xq = q(x)
    h1 = jnp.maximum(jnp.dot(xq, q(w1).T, precision=hp) + b1[:, 0], 0.0)
    h2 = jnp.maximum(jnp.dot(q(h1), q(w2).T, precision=hp) + b2[:, 0], 0.0)
    mlp = jnp.dot(q(h2), q(w3).T, precision=hp) + b3[:, 0]
    res = jnp.dot(xq, q(wr).T, precision=hp) + br[:, 0]
    return jnp.maximum(mlp + res, 0.0)


if __name__ == "__main__":
    key = jax.random.PRNGKey(0)
    batch, seq, dim_in = 2, 8, 32          # dim_middle = 16

    kx, kp = jax.random.split(key)
    x = jax.random.normal(kx, (batch, seq, dim_in), jnp.float32)
    params = init_params(kp, dim_in)

    out = jax.block_until_ready(predictor_forward(x, params))
    assert out.shape == (batch, seq, 1)
    ref_q = reference_forward_bf16(x, params)
    ref_f = reference_forward_f32(x, params)
    assert jnp.allclose(out, ref_q, atol=1e-4, rtol=1e-4), "mismatch vs bf16-aware reference"
    assert jnp.allclose(out, ref_f, atol=3e-2, rtol=3e-2), "mismatch vs f32 reference"

    # Multi-tile + ragged last block: M = 1200, tile_rows=512 -> evened to 4 tiles of 304.
    x_big = jax.random.normal(jax.random.PRNGKey(1), (4, 300, dim_in), jnp.float32)
    out_big = jax.block_until_ready(predictor_forward(x_big, params, tile_rows=512))
    ref_big = reference_forward_bf16(x_big, params)
    assert out_big.shape == (4, 300, 1)
    assert jnp.allclose(out_big, ref_big, atol=1e-4, rtol=1e-4), "tiled mismatch vs reference"

    print("KERNEL_OK")
</pallas_src>

<mosaic_0001>
module attributes {stable_mosaic.version = 11 : i64} {
  func.func @kernel(%arg0: i32, %arg1: memref<16x32xbf16, #tpu.memory_space<vmem>>, %arg2: memref<24x32xbf16, #tpu.memory_space<vmem>>, %arg3: memref<24x1xf32, #tpu.memory_space<vmem>>, %arg4: memref<16x16xbf16, #tpu.memory_space<vmem>>, %arg5: memref<16x1xf32, #tpu.memory_space<vmem>>, %arg6: memref<1x16xbf16, #tpu.memory_space<vmem>>, %arg7: memref<1x1xf32, #tpu.memory_space<smem>>, %arg8: memref<1x1x16xf32, #tpu.memory_space<vmem>>) attributes {dimension_semantics = [#tpu.dimension_semantics<parallel>], iteration_bounds = array<i64: 1>, scalar_prefetch = 0 : i64, scratch_operands = 0 : i64, tpu.core_type = #tpu.core_type<tc>, window_params = [{transform_indices = @transform_0, window_bounds = array<i64: 16, 32>}, {pipeline_mode = #tpu.pipeline_mode<synchronous>, transform_indices = @transform_1, window_bounds = array<i64: 24, 32>}, {pipeline_mode = #tpu.pipeline_mode<synchronous>, transform_indices = @transform_2, window_bounds = array<i64: 24, 1>}, {pipeline_mode = #tpu.pipeline_mode<synchronous>, transform_indices = @transform_3, window_bounds = array<i64: 16, 16>}, {pipeline_mode = #tpu.pipeline_mode<synchronous>, transform_indices = @transform_4, window_bounds = array<i64: 16, 1>}, {pipeline_mode = #tpu.pipeline_mode<synchronous>, transform_indices = @transform_5, window_bounds = array<i64: 1, 16>}, {transform_indices = @transform_6, window_bounds = array<i64: 1, 1>}, {transform_indices = @transform_7, window_bounds = array<i64: 1, 1, 16>}]} {
    %c0 = arith.constant 0 : index
    %c0_0 = arith.constant 0 : index
    %0 = vector.load %arg1[%c0, %c0_0] : memref<16x32xbf16, #tpu.memory_space<vmem>>, vector<16x32xbf16>
    %c0_1 = arith.constant 0 : index
    %c0_2 = arith.constant 0 : index
    %1 = vector.load %arg2[%c0_1, %c0_2] : memref<24x32xbf16, #tpu.memory_space<vmem>>, vector<24x32xbf16>
    %cst = arith.constant dense<0.000000e+00> : vector<24x16xf32>
    %2 = tpu.matmul %1, %0, %cst {dimension_numbers = #tpu.dot_dimension_numbers<[1], [1], [0], [0], [0, 0, 1, 0], [], []>} : vector<24x32xbf16>, vector<16x32xbf16>, vector<24x16xf32> -> vector<24x16xf32>
    %c0_3 = arith.constant 0 : index
    %c0_4 = arith.constant 0 : index
    %3 = vector.load %arg3[%c0_3, %c0_4] : memref<24x1xf32, #tpu.memory_space<vmem>>, vector<24x1xf32>
    %4 = vector.broadcast %3 : vector<24x1xf32> to vector<24x16xf32>
    %5 = arith.addf %2, %4 : vector<24x16xf32>
    %6 = vector.extract_strided_slice %5 {offsets = [0, 0], sizes = [16, 16], strides = [1, 1]} : vector<24x16xf32> to vector<16x16xf32>
    %cst_5 = arith.constant 0.000000e+00 : f32
    %7 = vector.broadcast %cst_5 : f32 to vector<16x16xf32>
    %8 = arith.maximumf %6, %7 : vector<16x16xf32>
    %9 = arith.truncf %8 : vector<16x16xf32> to vector<16x16xbf16>
    %10 = vector.extract_strided_slice %5 {offsets = [16, 0], sizes = [1, 16], strides = [1, 1]} : vector<24x16xf32> to vector<1x16xf32>
    %c0_6 = arith.constant 0 : index
    %c0_7 = arith.constant 0 : index
    %11 = vector.load %arg4[%c0_6, %c0_7] : memref<16x16xbf16, #tpu.memory_space<vmem>>, vector<16x16xbf16>
    %cst_8 = arith.constant dense<0.000000e+00> : vector<16x16xf32>
    %12 = tpu.matmul %11, %9, %cst_8 {dimension_numbers = #tpu.dot_dimension_numbers<[1], [0], [0], [1], [0, 0, 1, 1], [], []>} : vector<16x16xbf16>, vector<16x16xbf16>, vector<16x16xf32> -> vector<16x16xf32>
    %c0_9 = arith.constant 0 : index
    %c0_10 = arith.constant 0 : index
    %13 = vector.load %arg5[%c0_9, %c0_10] : memref<16x1xf32, #tpu.memory_space<vmem>>, vector<16x1xf32>
    %14 = vector.broadcast %13 : vector<16x1xf32> to vector<16x16xf32>
    %15 = arith.addf %12, %14 : vector<16x16xf32>
    %cst_11 = arith.constant 0.000000e+00 : f32
    %16 = vector.broadcast %cst_11 : f32 to vector<16x16xf32>
    %17 = arith.maximumf %15, %16 : vector<16x16xf32>
    %18 = arith.truncf %17 : vector<16x16xf32> to vector<16x16xbf16>
    %c0_12 = arith.constant 0 : index
    %c0_13 = arith.constant 0 : index
    %19 = vector.load %arg6[%c0_12, %c0_13] : memref<1x16xbf16, #tpu.memory_space<vmem>>, vector<1x16xbf16>
    %cst_14 = arith.constant dense<0.000000e+00> : vector<1x16xf32>
    %20 = tpu.matmul %19, %18, %cst_14 {dimension_numbers = #tpu.dot_dimension_numbers<[1], [0], [0], [1], [0, 0, 1, 1], [], []>} : vector<1x16xbf16>, vector<16x16xbf16>, vector<1x16xf32> -> vector<1x16xf32>
    %21 = arith.addf %20, %10 : vector<1x16xf32>
    %c0_15 = arith.constant 0 : index
    %c0_16 = arith.constant 0 : index
    %22 = memref.load %arg7[%c0_15, %c0_16] : memref<1x1xf32, #tpu.memory_space<smem>>
    %23 = vector.broadcast %22 : f32 to vector<1x16xf32>
    %24 = arith.addf %21, %23 : vector<1x16xf32>
    %cst_17 = arith.constant 0.000000e+00 : f32
    %25 = vector.broadcast %cst_17 : f32 to vector<1x16xf32>
    %26 = arith.maximumf %24, %25 : vector<1x16xf32>
    %27 = vector.shape_cast %26 : vector<1x16xf32> to vector<1x1x16xf32>
    %c0_18 = arith.constant 0 : index
    %c0_19 = arith.constant 0 : index
    %c0_20 = arith.constant 0 : index
    %28 = vector.load %arg8[%c0_18, %c0_19, %c0_20] : memref<1x1x16xf32, #tpu.memory_space<vmem>>, vector<1x1x16xf32>
    tpu.vector_store %arg8[%c0_18, %c0_19, %c0_20], %27 {strides = array<i32>} : memref<1x1x16xf32, #tpu.memory_space<vmem>>, vector<1x1x16xf32>,
    return
  }
  func.func @transform_0(%arg0: i32) -> (i32, i32) {
    %c0_i32 = arith.constant 0 : i32
    %c0_i32_0 = arith.constant 0 : i32
    return %arg0, %c0_i32 : i32, i32
  }
  func.func @transform_1(%arg0: i32) -> (i32, i32) {
    %c0_i32 = arith.constant 0 : i32
    %c0_i32_0 = arith.constant 0 : i32
    %c0_i32_1 = arith.constant 0 : i32
    return %c0_i32, %c0_i32_0 : i32, i32
  }
  func.func @transform_2(%arg0: i32) -> (i32, i32) {
    %c0_i32 = arith.constant 0 : i32
    %c0_i32_0 = arith.constant 0 : i32
    %c0_i32_1 = arith.constant 0 : i32
    return %c0_i32, %c0_i32_0 : i32, i32
  }
  func.func @transform_3(%arg0: i32) -> (i32, i32) {
    %c0_i32 = arith.constant 0 : i32
    %c0_i32_0 = arith.constant 0 : i32
    %c0_i32_1 = arith.constant 0 : i32
    return %c0_i32, %c0_i32_0 : i32, i32
  }
  func.func @transform_4(%arg0: i32) -> (i32, i32) {
    %c0_i32 = arith.constant 0 : i32
    %c0_i32_0 = arith.constant 0 : i32
    %c0_i32_1 = arith.constant 0 : i32
    return %c0_i32, %c0_i32_0 : i32, i32
  }
  func.func @transform_5(%arg0: i32) -> (i32, i32) {
    %c0_i32 = arith.constant 0 : i32
    %c0_i32_0 = arith.constant 0 : i32
    %c0_i32_1 = arith.constant 0 : i32
    return %c0_i32, %c0_i32_0 : i32, i32
  }
  func.func @transform_6(%arg0: i32) -> (i32, i32) {
    %c0_i32 = arith.constant 0 : i32
    %c0_i32_0 = arith.constant 0 : i32
    %c0_i32_1 = arith.constant 0 : i32
    return %c0_i32, %c0_i32_0 : i32, i32
  }
  func.func @transform_7(%arg0: i32) -> (i32, i32, i32) {
    %c0_i32 = arith.constant 0 : i32
    %c0_i32_0 = arith.constant 0 : i32
    %c0_i32_1 = arith.constant 0 : i32
    return %arg0, %c0_i32, %c0_i32_0 : i32, i32, i32
  }
}

</mosaic_0001>

<llo_original>
// kernel: predictor_forward.1
$region0: #{predictor_forward.1}
  #allocation0 [shape = 'u32[]', space=smem, size = 0x4, offset = 0x4, fixed_abs, tag = 'smem constant byte address 0x4 - core index']
  #allocation1 [shape = 'u32[144,128]{1,0:T(1,128)}', space=vmem, size = 0x12000, scoped, tag = 'internal scratch']
  #allocation2 [shape = 'f32[1,1]{1,0:T(1,128)S(6)}', space=smem, size = 0x200, scoped, tag = 'scoped memory for predictor_forward.1']
  %s0 = inlined_call_operand.vmem [shape: bf16[16,32], index: 0, kind: input, shape index: {}]
  %s1 = inlined_call_operand.vmem [shape: bf16[24,32], index: 1, kind: input, shape index: {}]
  %s2 = inlined_call_operand.vmem [shape: f32[24,1], index: 2, kind: input, shape index: {}]
  %s3 = inlined_call_operand.vmem [shape: bf16[16,16], index: 3, kind: input, shape index: {}]
  %s4 = inlined_call_operand.vmem [shape: f32[16,1], index: 4, kind: input, shape index: {}]
  %s5 = inlined_call_operand.vmem [shape: bf16[1,16], index: 5, kind: input, shape index: {}]
  %s6 = inlined_call_operand.<no memory space> [shape: f32[1,1], index: 6, kind: input, shape index: {}]
  %s7 = inlined_call_operand.vmem [shape: f32[1,1,16], index: 7, kind: output, shape index: {}]
  %s8 = sld [smem:[#allocation0]]
  $region38: #{predictor_forward.1} parent=0
    _
  %s10 = ssub.s32 1, %s8
  %s11 = scalar_select 0, %s10, %s8
  %12 = sst [smem:[#allocation2]] %s6
  // Predicated region
  $region2: #{predictor_forward.1} parent=0 // pred_check
    _
  $region3: #{predictor_forward.1} parent=0 // pred_check_branch
    %14 = sbr.rel (0) target = $region5
  $region4: #{predictor_forward.1} parent=0 // pred_region
    _
  $region5: #{predictor_forward.1} parent=0 // pred_fallthru
    _
  // Predicated region
  $region6: #{predictor_forward.1} parent=0 // pred_check
    _
  $region7: #{predictor_forward.1} parent=0 // pred_check_branch
    %16 = sbr.rel (0) target = $region9
  $region8: #{predictor_forward.1} parent=0 // pred_region
    _
  $region9: #{predictor_forward.1} parent=0 // pred_fallthru
    _
  // Predicated region
  $region10: #{predictor_forward.1} parent=0 // pred_check
    _
  $region11: #{predictor_forward.1} parent=0 // pred_check_branch
    %18 = sbr.rel (0) target = $region13
  $region12: #{predictor_forward.1} parent=0 // pred_region
    _
  $region13: #{predictor_forward.1} parent=0 // pred_fallthru
    _
  // Predicated region
  $region14: #{predictor_forward.1} parent=0 // pred_check
    _
  $region15: #{predictor_forward.1} parent=0 // pred_check_branch
    %20 = sbr.rel (0) target = $region17
  $region16: #{predictor_forward.1} parent=0 // pred_region
    _
  $region17: #{predictor_forward.1} parent=0 // pred_fallthru
    _
  // Predicated region
  $region18: #{predictor_forward.1} parent=0 // pred_check
    _
  $region19: #{predictor_forward.1} parent=0 // pred_check_branch
    %22 = sbr.rel (0) target = $region21
  $region20: #{predictor_forward.1} parent=0 // pred_region
    _
  $region21: #{predictor_forward.1} parent=0 // pred_fallthru
    _
  // Predicated region
  $region22: #{predictor_forward.1} parent=0 // pred_check
    _
  $region23: #{predictor_forward.1} parent=0 // pred_check_branch
    %24 = sbr.rel (0) target = $region25
  $region24: #{predictor_forward.1} parent=0 // pred_region
    _
  $region25: #{predictor_forward.1} parent=0 // pred_fallthru
    _
  // Predicated region
  $region26: #{predictor_forward.1} parent=0 // pred_check
    _
  $region27: #{predictor_forward.1} parent=0 // pred_check_branch
    %26 = sbr.rel (0) target = $region29
  $region28: #{predictor_forward.1} parent=0 // pred_region
    _
  $region29: #{predictor_forward.1} parent=0 // pred_fallthru
    _
  %v28 = vld [vmem:[%s0] sm:$0xf]
  %v29 = vld [vmem:[%s0 + $0x4] sm:$0xf]
  %v30 = vld [vmem:[%s1] sm:$0xf]
  %v31 = vld [vmem:[%s1 + $0x4] sm:$0xf]
  %v32 = vld [vmem:[%s1 + $0x8] sm:$0xf]
  %v33 = vld [vmem:[%s2] sm:$0xff]
  %v34 = vld [vmem:[%s2 + $0x8] sm:$0xff]
  %v35 = vld [vmem:[%s2 + $0x10] sm:$0xff]
  %37 = vset.pattern.permute.xlu0 0
  %38 = vperm.xlu0 %37, %v33
  %v39 = vpop.permute.xlu0 %38
  %42 = vset.pattern.permute.xlu0 0
  %43 = vperm.xlu0 %42, %v34
  %v44 = vpop.permute.xlu0 %43
  %47 = vset.pattern.permute.xlu0 0
  %48 = vperm.xlu0 %47, %v35
  %v49 = vpop.permute.xlu0 %48
  %v54 = vunpack.c.l.b16 %v30
  %v55 = vunpack.c.l.b16 %v31
  %v56 = vunpack.c.l.b16 %v32
  %v57 = vpack.c.b16 %v55, %v54
  %v58 = vpack.c.b16 %v56, %v56
  %v61 = vunpack.c.l.b16 %v28
  %v62 = vunpack.c.l.b16 %v29
  %v63 = vpack.c.b16 %v62, %v61
  %vm64 = vcmask 261120
  %v66 = vsel %vm64, %v57, 0
  %v69 = vsel %vm64, %v58, 0
  %v72 = vsel %vm64, %v63, 0
  %74 = vmatprep.subr.bf16.mxu0 0
  %75 = vmatpush1.bf16.xpose.msra.mxu0 %v72
  %76 = vmatprep.subr.bf16.mxu0 0
  %77 = vmatpush1.bf16.xpose.msra.mxu0 0
  %78 = vmatprep.subr.bf16.mxu0 0
  %79 = vmatpush1.bf16.xpose.msra.mxu0 0
  %80 = vmatprep.subr.bf16.mxu0 0
  %81 = vmatpush1.bf16.xpose.msra.mxu0 0
  %82 = vmatprep.subr.bf16.mxu0 0
  %83 = vmatpush1.bf16.xpose.msra.mxu0 0
  %84 = vmatprep.subr.bf16.mxu0 0
  %85 = vmatpush1.bf16.xpose.msra.mxu0 0
  %86 = vmatprep.subr.bf16.mxu0 0
  %87 = vmatpush1.bf16.xpose.msra.mxu0 0
  %88 = vmatprep.subr.bf16.mxu0 0
  %89 = vmatpush1.bf16.xpose.msra.mxu0 0
  %90 = vmatprep.subr.bf16.mxu0 0
  %91 = vmatpush1.bf16.xpose.msra.mxu0 0
  %92 = vmatprep.subr.bf16.mxu0 0
  %93 = vmatpush1.bf16.xpose.msra.mxu0 0
  %94 = vmatprep.subr.bf16.mxu0 0
  %95 = vmatpush1.bf16.xpose.msra.mxu0 0
  %96 = vmatprep.subr.bf16.mxu0 0
  %97 = vmatpush1.bf16.xpose.msra.mxu0 0
  %98 = vmatprep.subr.bf16.mxu0 0
  %99 = vmatpush1.bf16.xpose.msra.mxu0 0
  %100 = vmatprep.subr.bf16.mxu0 0
  %101 = vmatpush1.bf16.xpose.msra.mxu0 0
  %102 = vmatprep.subr.bf16.mxu0 0
  %103 = vmatpush1.bf16.xpose.msra.mxu0 0
  %104 = vmatprep.subr.bf16.mxu0 0
  %105 = vmatpush1.bf16.xpose.msra.mxu0 0
  %106 = vmatprep.mubr.bf16.mxu0 0
  %107 = vmatmul.mubr.bf16.gmra.mrb[0].mxu0 %v66
  %v108 = vpop.f32.mrb[0].mxu0
  %v109 = vadd.f32 %v39, %v108
  %v110 = vpop.f32.mrb[0].mxu0
  %v111 = vpop.f32.mrb[0].mxu0
  %v112 = vadd.f32 %v44, %v111
  %v113 = vpop.f32.mrb[0].mxu0
  %114 = vmatprep.mubr.bf16.mxu0 0
  %115 = vmatmul.mubr.bf16.gmra.mrb[0].mxu0 %v69
  %v116 = vpop.f32.mrb[0].mxu0
  %v117 = vadd.f32 %v49, %v116
  %v118 = vpop.f32.mrb[0].mxu0
  %v119 = vpop.f32.mrb[0].mxu0
  %v120 = vpop.f32.mrb[0].mxu0
  %121 = vdwg.mxu0
  %v122 = vmax.f32 %v109, 0.0
  %v123 = vmax.f32 %v112, 0.0
  %v124 = vpack.c.bf16 %v123, %v122
  %v125 = vld [vmem:[%s3] sm:$0xf]
  %v126 = vld [vmem:[%s3 + $0x4] sm:$0xf]
  %v127 = vld [vmem:[%s4] sm:$0xff]
  %v128 = vld [vmem:[%s4 + $0x8] sm:$0xff]
  %130 = vset.pattern.permute.xlu0 0
  %131 = vperm.xlu0 %130, %v127
  %v132 = vpop.permute.xlu0 %131
  %135 = vset.pattern.permute.xlu0 0
  %136 = vperm.xlu0 %135, %v128
  %v137 = vpop.permute.xlu0 %136
  %v141 = vunpack.c.l.b16 %v125
  %v142 = vunpack.c.l.b16 %v126
  %v143 = vpack.c.b16 %v142, %v141
  %vm144 = vcmask 130048
  %v146 = vsel %vm144, %v143, 0
  %148 = vmatprep.subr.bf16.mxu0 0
  %149 = vmatpush1.bf16.msra.mxu0 %v124
  %150 = vmatprep.subr.bf16.mxu0 0
  %151 = vmatpush1.bf16.msra.mxu0 0
  %152 = vmatprep.subr.bf16.mxu0 0
  %153 = vmatpush1.bf16.msra.mxu0 0
  %154 = vmatprep.subr.bf16.mxu0 0
  %155 = vmatpush1.bf16.msra.mxu0 0
  %156 = vmatprep.subr.bf16.mxu0 0
  %157 = vmatpush1.bf16.msra.mxu0 0
  %158 = vmatprep.subr.bf16.mxu0 0
  %159 = vmatpush1.bf16.msra.mxu0 0
  %160 = vmatprep.subr.bf16.mxu0 0
  %161 = vmatpush1.bf16.msra.mxu0 0
  %162 = vmatprep.subr.bf16.mxu0 0
  %163 = vmatpush1.bf16.msra.mxu0 0
  %164 = vmatprep.subr.bf16.mxu0 0
  %165 = vmatpush1.bf16.msra.mxu0 0
  %166 = vmatprep.subr.bf16.mxu0 0
  %167 = vmatpush1.bf16.msra.mxu0 0
  %168 = vmatprep.subr.bf16.mxu0 0
  %169 = vmatpush1.bf16.msra.mxu0 0
  %170 = vmatprep.subr.bf16.mxu0 0
  %171 = vmatpush1.bf16.msra.mxu0 0
  %172 = vmatprep.subr.bf16.mxu0 0
  %173 = vmatpush1.bf16.msra.mxu0 0
  %174 = vmatprep.subr.bf16.mxu0 0
  %175 = vmatpush1.bf16.msra.mxu0 0
  %176 = vmatprep.subr.bf16.mxu0 0
  %177 = vmatpush1.bf16.msra.mxu0 0
  %178 = vmatprep.subr.bf16.mxu0 0
  %179 = vmatpush1.bf16.msra.mxu0 0
  %180 = vmatprep.mubr.bf16.mxu0 0
  %181 = vmatmul.mubr.bf16.gmra.mrb[0].mxu0 %v146
  %v182 = vpop.f32.mrb[0].mxu0
  %v183 = vadd.f32 %v132, %v182
  %v184 = vpop.f32.mrb[0].mxu0
  %v185 = vpop.f32.mrb[0].mxu0
  %v186 = vadd.f32 %v137, %v185
  %v187 = vpop.f32.mrb[0].mxu0
  %188 = vdwg.mxu0
  %v189 = vmax.f32 %v183, 0.0
  %v190 = vmax.f32 %v186, 0.0
  %v191 = vpack.c.bf16 %v190, %v189
  %v192 = vld [vmem:[%s5] sm:$0x1]
  %v194 = vsel %vm144, %v192, 0
  %196 = vmatprep.subr.bf16.mxu0 0
  %197 = vmatpush1.bf16.msra.mxu0 %v191
  %198 = vmatprep.subr.bf16.mxu0 0
  %199 = vmatpush1.bf16.msra.mxu0 0
  %200 = vmatprep.subr.bf16.mxu0 0
  %201 = vmatpush1.bf16.msra.mxu0 0
  %202 = vmatprep.subr.bf16.mxu0 0
  %203 = vmatpush1.bf16.msra.mxu0 0
  %204 = vmatprep.subr.bf16.mxu0 0
  %205 = vmatpush1.bf16.msra.mxu0 0
  %206 = vmatprep.subr.bf16.mxu0 0
  %207 = vmatpush1.bf16.msra.mxu0 0
  %208 = vmatprep.subr.bf16.mxu0 0
  %209 = vmatpush1.bf16.msra.mxu0 0
  %210 = vmatprep.subr.bf16.mxu0 0
  %211 = vmatpush1.bf16.msra.mxu0 0
  %212 = vmatprep.subr.bf16.mxu0 0
  %213 = vmatpush1.bf16.msra.mxu0 0
  %214 = vmatprep.subr.bf16.mxu0 0
  %215 = vmatpush1.bf16.msra.mxu0 0
  %216 = vmatprep.subr.bf16.mxu0 0
  %217 = vmatpush1.bf16.msra.mxu0 0
  %218 = vmatprep.subr.bf16.mxu0 0
  %219 = vmatpush1.bf16.msra.mxu0 0
  %220 = vmatprep.subr.bf16.mxu0 0
  %221 = vmatpush1.bf16.msra.mxu0 0
  %222 = vmatprep.subr.bf16.mxu0 0
  %223 = vmatpush1.bf16.msra.mxu0 0
  %224 = vmatprep.subr.bf16.mxu0 0
  %225 = vmatpush1.bf16.msra.mxu0 0
  %226 = vmatprep.subr.bf16.mxu0 0
  %227 = vmatpush1.bf16.msra.mxu0 0
  %228 = vmatprep.mubr.bf16.mxu0 0
  %229 = vmatmul.mubr.bf16.gmra.mrb[0].mxu0 %v194
  %v230 = vpop.f32.mrb[0].mxu0
  %v231 = vadd.f32 %v117, %v230
  %v232 = vpop.f32.mrb[0].mxu0
  %v233 = vpop.f32.mrb[0].mxu0
  %v234 = vpop.f32.mrb[0].mxu0
  %235 = vdwg.mxu0
  %s236 = sld [smem:[#allocation2]]
  %v237 = vstv %s236
  %v238 = vadd.f32 %v231, %v237
  %v239 = vmax.f32 %v238, 0.0
  %vm240 = vcmask 122880
  %241 = vst.msk [vmem:[%s7] sm:$0x1] %vm240, %v239
  // Predicated region
  $region30: #{predictor_forward.1} parent=0 // pred_check
    _
  $region31: #{predictor_forward.1} parent=0 // pred_check_branch
    %243 = sbr.rel (0) target = $region33
  $region32: #{predictor_forward.1} parent=0 // pred_region
    _
  $region33: #{predictor_forward.1} parent=0 // pred_fallthru
    _
  // Predicated region
  $region34: #{predictor_forward.1} parent=0 // pred_check
    _
  $region35: #{predictor_forward.1} parent=0 // pred_check_branch
    %245 = sbr.rel (0) target = $region37
  $region36: #{predictor_forward.1} parent=0 // pred_region
    _
  $region37: #{predictor_forward.1} parent=0 // pred_fallthru
    _

</llo_original>
